<compile_context>
chip_gen: v6e
topology: v6e:2x2x1
jax: 0.10.0
libtpu: 0.0.40
codegen_flags: <defaults>
</compile_context>

<pallas_src>
import jax
import jax.numpy as jnp
from jax.experimental import pallas as pl
from jax.experimental.pallas import tpu as pltpu

N_PAD = 128  # lane-dense output width (10 -> 128), sliced back in the wrapper


def _round_up(x, m):
    return ((x + m - 1) // m) * m


def linear_kernel(x_ref, w_ref, b_ref, o_ref):
    # MXU matmul with f32 accumulation + lane-aligned bias add.
    acc = jnp.dot(x_ref[...], w_ref[...], preferred_element_type=jnp.float32)
    o_ref[...] = (acc + b_ref[...]).astype(o_ref.dtype)


def prepare_params(weight, bias):
    """One-time parameter prep (hoisted out of the per-call path).

    weight: (10, 784) f32, PyTorch nn.Linear layout.
    bias:   (10,)    f32.
    Returns (w_p, b_p): (784, 128) transposed/padded weight, (1, 128) bias.
    Only the output dim is padded (lane-dense stores); K stays 784.
    """
    N, D = weight.shape
    w_p = jnp.zeros((D, N_PAD), weight.dtype).at[:, :N].set(weight.T)
    b_p = jnp.zeros((1, N_PAD), jnp.float32).at[0, :N].set(
        bias.astype(jnp.float32))
    return w_p, b_p


def _pick_tb(B, cap=1024):
    # >= 2 grid steps when possible (v7x megacore), multiple of 8, capped.
    if B <= 8:
        return 8
    return min(_round_up(pl.cdiv(B, 2), 8), cap)


def mnist_logistic_forward(x, w_p, b_p):
    """Forward pass of Mnist_Logistic.

    x:   (B, 784) f32 input batch (passed straight to the kernel, no padding).
    w_p: (784, 128) pre-padded weight from prepare_params.
    b_p: (1, 128)   pre-padded bias   from prepare_params.
    Returns (B, 10) logits.
    """
    B, D = x.shape
    TB = _pick_tb(B)
    grid = (pl.cdiv(B, TB),)

    out = pl.pallas_call(
        linear_kernel,
        out_shape=jax.ShapeDtypeStruct((B, N_PAD), x.dtype),
        grid=grid,
        in_specs=[
            # x tiled over batch; weight & bias grid-invariant (stay resident).
            pl.BlockSpec((TB, D), lambda i: (i, 0)),
            pl.BlockSpec((D, N_PAD), lambda i: (0, 0)),
            pl.BlockSpec((1, N_PAD), lambda i: (0, 0)),
        ],
        out_specs=pl.BlockSpec((TB, N_PAD), lambda i: (i, 0)),
        compiler_params=pltpu.CompilerParams(
            dimension_semantics=("parallel",)
        ),
    )(x, w_p, b_p)

    # Strip the lane padding back off (10 real output columns).
    return out[:, :10]


if __name__ == "__main__":
    key = jax.random.PRNGKey(0)
    kx, kw, kb = jax.random.split(key, 3)

    B, D, N = 64, 784, 10  # bs = 64 as in the tutorial

    # Parameters matching nn.Linear(784, 10): weight (10, 784), bias (10,).
    bound = 1.0 / (D ** 0.5)
    weight = jax.random.uniform(kw, (N, D), jnp.float32, -bound, bound)
    bias = jax.random.uniform(kb, (N,), jnp.float32, -bound, bound)

    x = jax.random.uniform(kx, (B, D), jnp.float32)  # MNIST-like pixels

    # One-time parameter prep (outside the per-call path).
    w_p, b_p = prepare_params(weight, bias)

    y = mnist_logistic_forward(x, w_p, b_p)
    y = jax.block_until_ready(y)

    # Reference check against plain JAX (same semantics as PyTorch F.linear).
    y_ref = x @ weight.T + bias
    assert y.shape == (B, N)
    assert jnp.allclose(y, y_ref, atol=1e-5, rtol=1e-5)

    print("KERNEL_OK")
</pallas_src>

<mosaic_0001>
module attributes {stable_mosaic.version = 11 : i64} {
  func.func @linear_kernel(%arg0: i32, %arg1: memref<32x784xf32, #tpu.memory_space<vmem>>, %arg2: memref<784x128xf32, #tpu.memory_space<vmem>>, %arg3: memref<1x128xf32, #tpu.memory_space<vmem>>, %arg4: memref<32x128xf32, #tpu.memory_space<vmem>>) attributes {dimension_semantics = [#tpu.dimension_semantics<parallel>], iteration_bounds = array<i64: 2>, scalar_prefetch = 0 : i64, scratch_operands = 0 : i64, tpu.core_type = #tpu.core_type<tc>, window_params = [{transform_indices = @transform_0, window_bounds = array<i64: 32, 784>}, {pipeline_mode = #tpu.pipeline_mode<synchronous>, transform_indices = @transform_1, window_bounds = array<i64: 784, 128>}, {pipeline_mode = #tpu.pipeline_mode<synchronous>, transform_indices = @transform_2, window_bounds = array<i64: 1, 128>}, {transform_indices = @transform_3, window_bounds = array<i64: 32, 128>}]} {
    %c0 = arith.constant 0 : index
    %c0_0 = arith.constant 0 : index
    %0 = vector.load %arg1[%c0, %c0_0] : memref<32x784xf32, #tpu.memory_space<vmem>>, vector<32x784xf32>
    %c0_1 = arith.constant 0 : index
    %c0_2 = arith.constant 0 : index
    %1 = vector.load %arg2[%c0_1, %c0_2] : memref<784x128xf32, #tpu.memory_space<vmem>>, vector<784x128xf32>
    %cst = arith.constant dense<0.000000e+00> : vector<32x128xf32>
    %2 = tpu.matmul %0, %1, %cst {dimension_numbers = #tpu.dot_dimension_numbers<[1], [0], [0], [1], [0, 0, 1, 1], [], []>} : vector<32x784xf32>, vector<784x128xf32>, vector<32x128xf32> -> vector<32x128xf32>
    %c0_3 = arith.constant 0 : index
    %c0_4 = arith.constant 0 : index
    %3 = vector.load %arg3[%c0_3, %c0_4] : memref<1x128xf32, #tpu.memory_space<vmem>>, vector<1x128xf32>
    %4 = vector.broadcast %3 : vector<1x128xf32> to vector<32x128xf32>
    %5 = arith.addf %2, %4 : vector<32x128xf32>
    %c0_5 = arith.constant 0 : index
    %c0_6 = arith.constant 0 : index
    %6 = vector.load %arg4[%c0_5, %c0_6] : memref<32x128xf32, #tpu.memory_space<vmem>>, vector<32x128xf32>
    tpu.vector_store %arg4[%c0_5, %c0_6], %5 {strides = array<i32>} : memref<32x128xf32, #tpu.memory_space<vmem>>, vector<32x128xf32>,
    return
  }
  func.func @transform_0(%arg0: i32) -> (i32, i32) {
    %c0_i32 = arith.constant 0 : i32
    %c0_i32_0 = arith.constant 0 : i32
    return %arg0, %c0_i32 : i32, i32
  }
  func.func @transform_1(%arg0: i32) -> (i32, i32) {
    %c0_i32 = arith.constant 0 : i32
    %c0_i32_0 = arith.constant 0 : i32
    %c0_i32_1 = arith.constant 0 : i32
    return %c0_i32, %c0_i32_0 : i32, i32
  }
  func.func @transform_2(%arg0: i32) -> (i32, i32) {
    %c0_i32 = arith.constant 0 : i32
    %c0_i32_0 = arith.constant 0 : i32
    %c0_i32_1 = arith.constant 0 : i32
    return %c0_i32, %c0_i32_0 : i32, i32
  }
  func.func @transform_3(%arg0: i32) -> (i32, i32) {
    %c0_i32 = arith.constant 0 : i32
    %c0_i32_0 = arith.constant 0 : i32
    return %arg0, %c0_i32 : i32, i32
  }
}

</mosaic_0001>

<llo_original>
// kernel: tpu_custom_call.1
$region0: #{tpu_custom_call.1}
  #allocation0 [shape = 'u32[]', space=smem, size = 0x4, offset = 0x4, fixed_abs, tag = 'smem constant byte address 0x4 - core index']
  #allocation1 [shape = 'u32[144,128]{1,0:T(1,128)}', space=vmem, size = 0x12000, scoped, tag = 'internal scratch']
  %s0 = inlined_call_operand.hbm [shape: f32[64,784], index: 0, kind: input, shape index: {}]
  %s1 = inlined_call_operand.hbm [shape: f32[784,128], index: 1, kind: input, shape index: {}]
  %s2 = inlined_call_operand.vmem [shape: f32[1,128], index: 2, kind: input, shape index: {}]
  %s3 = inlined_call_operand.hbm [shape: f32[64,128], index: 3, kind: output, shape index: {}]
  %s4 = sld [smem:[#allocation0]]
  $region53: #{tpu_custom_call.1} parent=0
    _
  %s6 = ssub.s32 1, %s4
  %s7 = scalar_select 0, %s6, %s4
  $region1: #{tpu_custom_call.1} parent=0
    #allocation2 [shape = 'u8[229376]{0}', space=vmem, size = 0x38000, scoped, tag = 'input window, operand 0']
    #allocation3 [shape = 's32[2]{0}', space=sflag, size = 0x8, scoped, tag = 'scoped memory for tpu_custom_call.1']
    #allocation4 [shape = 's32[2]{0}', space=sflag, size = 0x8, scoped, tag = 'scoped memory for tpu_custom_call.1']
    #allocation5 [shape = 'u8[401408]{0}', space=vmem, size = 0x62000, scoped, tag = 'input window, operand 1, single buffered']
    #allocation6 [shape = 's32[1]{0}', space=sflag, size = 0x4, scoped, tag = 'scoped memory for tpu_custom_call.1']
    #allocation7 [shape = 'u8[32768]{0}', space=vmem, size = 0x8000, scoped, tag = 'output window, operand 0']
    %8 = vsyncpa [#allocation3], 0
    %s9 = scalar_lea.sflag [#allocation3], 1
    %10 = vsyncpa %s9, 0
    %11 = vsyncpa [#allocation6], 0
    %12 = vsyncpa [#allocation4], 0
    %s13 = scalar_lea.sflag [#allocation4], 1
    %14 = vsyncpa %s13, 0
    loop: start=0, step=1, limit=4
    $region2: #{tpu_custom_call.1} parent=1 // loop_pre_header
      _
    $region3: #{tpu_custom_call.1} parent=1 // loop_header
      %s16 = sphi 0, %s20
      %p17 = scmp.ge.s32.totalorder %s16, 4
      %s26 = sphi 0, %s28
      %s29 = sphi 0, %s26
      %s30 = sphi 0, %s29
      %s46 = sphi 0, %s30
      %s50 = sphi 0, %s50
      %s52 = sphi 0, %s50
      %s53 = sphi 0, %s52
      %s67 = sphi 0, %s53
      %s71 = sphi 0, %s71
      %s73 = sphi 0, %s71
      %s74 = sphi 0, %s73
      %s88 = sphi 0, %s74
      %s94 = sphi 0, %s96
      %s97 = sphi 0, %s94
      %s98 = sphi 0, %s97
      %s114 = sphi 0, %s98
    $region4: #{tpu_custom_call.1} parent=1 // loop_header_branch
      %19 = sbr.rel (%p17) target = $region8
    $region5: #{tpu_custom_call.1} parent=1 // loop_body
      %s21 = ssub.s32 %s16, 1
      %s22 = ssub.s32 %s16, 2
      %s23 = sadd.s32 %s16, 1
      %s24 = ssub.s32 %s16, %s23
      %p25 = scmp.eq.s32.totalorder %s24, 0
      %s27 = sadd.s32 %s26, 1
      %s28 = scalar_select %p25, %s26, %s27
      %p31 = pneg %p25
      %p32 = scmp.eq.s32.totalorder %s16, 1
      %p33 = por %p31, %p32
      %p34 = scmp.ne.s32.totalorder %s26, %s29
      %p35 = scmp.eq.s32.totalorder %s16, 0
      %p36 = por %p34, %p35
      %p37 = scmp.ne.s32.totalorder %s26, %s29
      %p38 = scmp.eq.s32.totalorder %s21, 1
      %p39 = por %p37, %p38
      %p40 = scmp.ne.s32.totalorder %s29, %s30
      %p41 = scmp.eq.s32.totalorder %s21, 0
      %p42 = por %p40, %p41
      %p43 = scmp.ne.s32.totalorder %s29, %s30
      %p44 = scmp.eq.s32.totalorder %s22, 1
      %p45 = por %p43, %p44
      %p47 = scmp.ne.s32.totalorder %s30, %s46
      %p48 = scmp.eq.s32.totalorder %s22, 0
      %p49 = por %p47, %p48
      %s51 = sadd.s32 %s50, 1
      %p54 = scmp.eq.s32.totalorder %s16, 1
      %p55 = scmp.ne.s32.totalorder %s50, %s52
      %p56 = scmp.eq.s32.totalorder %s16, 0
      %p57 = por %p55, %p56
      %p58 = scmp.ne.s32.totalorder %s50, %s52
      %p59 = scmp.eq.s32.totalorder %s21, 1
      %p60 = por %p58, %p59
      %p61 = scmp.ne.s32.totalorder %s52, %s53
      %p62 = scmp.eq.s32.totalorder %s21, 0
      %p63 = por %p61, %p62
      %p64 = scmp.ne.s32.totalorder %s52, %s53
      %p65 = scmp.eq.s32.totalorder %s22, 1
      %p66 = por %p64, %p65
      %p68 = scmp.ne.s32.totalorder %s53, %s67
      %p69 = scmp.eq.s32.totalorder %s22, 0
      %p70 = por %p68, %p69
      %s72 = sadd.s32 %s71, 1
      %p75 = scmp.eq.s32.totalorder %s16, 1
      %p76 = scmp.ne.s32.totalorder %s71, %s73
      %p77 = scmp.eq.s32.totalorder %s16, 0
      %p78 = por %p76, %p77
      %p79 = scmp.ne.s32.totalorder %s71, %s73
      %p80 = scmp.eq.s32.totalorder %s21, 1
      %p81 = por %p79, %p80
      %p82 = scmp.ne.s32.totalorder %s73, %s74
      %p83 = scmp.eq.s32.totalorder %s21, 0
      %p84 = por %p82, %p83
      %p85 = scmp.ne.s32.totalorder %s73, %s74
      %p86 = scmp.eq.s32.totalorder %s22, 1
      %p87 = por %p85, %p86
      %p89 = scmp.ne.s32.totalorder %s74, %s88
      %p90 = scmp.eq.s32.totalorder %s22, 0
      %p91 = por %p89, %p90
      %s92 = ssub.s32 %s16, %s23
      %p93 = scmp.eq.s32.totalorder %s92, 0
      %s95 = sadd.s32 %s94, 1
      %s96 = scalar_select %p93, %s94, %s95
      %p99 = pneg %p93
      %p100 = scmp.eq.s32.totalorder %s16, 1
      %p101 = por %p99, %p100
      %p102 = scmp.ne.s32.totalorder %s94, %s97
      %p103 = scmp.eq.s32.totalorder %s16, 0
      %p104 = por %p102, %p103
      %p105 = scmp.ne.s32.totalorder %s94, %s97
      %p106 = scmp.eq.s32.totalorder %s21, 1
      %p107 = por %p105, %p106
      %p108 = scmp.ne.s32.totalorder %s97, %s98
      %p109 = scmp.eq.s32.totalorder %s21, 0
      %p110 = por %p108, %p109
      %p111 = scmp.ne.s32.totalorder %s97, %s98
      %p112 = scmp.eq.s32.totalorder %s22, 1
      %p113 = por %p111, %p112
      %p115 = scmp.ne.s32.totalorder %s98, %s114
      %p116 = scmp.eq.s32.totalorder %s22, 0
      %p117 = por %p115, %p116
      %p118 = scmp.le.s32.totalorder 1, %s16
      %p119 = scmp.lt.s32.totalorder %s16, 3
      %p120 = pnand %p118, %p119
      %p121 = pneg %p120
      // Predicated region
      $region9: #{tpu_custom_call.1} parent=5 // pred_check
        _
      $region10: #{tpu_custom_call.1} parent=5 // pred_check_branch
        %123 = sbr.rel (%p120) target = $region12
      $region11: #{tpu_custom_call.1} parent=5 // pred_region
        %s124 = ssub.s32 %s16, 1
        // Predicated region
        $region13: #{tpu_custom_call.1} parent=11 // pred_check
          %p125 = pneg %p63
        $region14: #{tpu_custom_call.1} parent=11 // pred_check_branch
          %127 = sbr.rel (%p125) target = $region16
        $region15: #{tpu_custom_call.1} parent=11 // pred_region
          %s129 = ssub.s32 12544, 12544
          %130 = vsyncadd [#allocation6], %s129
          %s131 = sshll.u32 [#allocation5], 4
          %s132 = int_to_ptr.vmem [resolvable:$true] %s131
          %137 = dma.hbm_to_vmem [thread:$0]  %s1, 12544, %s132, [#allocation6], 128, 128, 8
        $region16: #{tpu_custom_call.1} parent=11 // pred_fallthru
          _
        // Predicated region
        $region17: #{tpu_custom_call.1} parent=11 // pred_check
          %p138 = pneg %p84
        $region18: #{tpu_custom_call.1} parent=11 // pred_check_branch
          %140 = sbr.rel (%p138) target = $region20
        $region19: #{tpu_custom_call.1} parent=11 // pred_region
          _
        $region20: #{tpu_custom_call.1} parent=11 // pred_fallthru
          _
      $region12: #{tpu_custom_call.1} parent=5 // pred_fallthru
        _
      %p141 = scmp.lt.s32.totalorder %s16, 2
      // Predicated region
      $region21: #{tpu_custom_call.1} parent=5 // pred_check
        %p142 = pneg %p141
      $region22: #{tpu_custom_call.1} parent=5 // pred_check_branch
        %144 = sbr.rel (%p142) target = $region24
      $region23: #{tpu_custom_call.1} parent=5 // pred_region
        // Predicated region
        $region25: #{tpu_custom_call.1} parent=23 // pred_check
          %p145 = pneg %p36
        $region26: #{tpu_custom_call.1} parent=23 // pred_check_branch
          %147 = sbr.rel (%p145) target = $region28
        $region27: #{tpu_custom_call.1} parent=23 // pred_region
          %s148 = sand.u32 %s26, 1
          %s149 = scalar_lea.sflag [#allocation3], %s148
          %s150 = sand.u32 %s26, 1
          %s151 = smul.addr %s150, 224
          %s152 = scalar_lea.vmem [#allocation2], %s151
          %s153 = smul.u32 4, %s16
          %s155 = ssub.s32 3584, 3584
          %156 = vsyncadd %s149, %s155
          %s157 = smul.addr %s153, 7
          %s158 = smul.addr %s157, 128
          %s159 = scalar_lea.hbm %s0, %s158
          %s160 = sshll.u32 %s152, 4
          %s161 = int_to_ptr.vmem [resolvable:$true] %s160
          %166 = dma.hbm_to_vmem [thread:$0]  %s159, 3584, %s161, %s149, 896, 896, 56
        $region28: #{tpu_custom_call.1} parent=23 // pred_fallthru
          _
      $region24: #{tpu_custom_call.1} parent=5 // pred_fallthru
        _
      %p167 = scmp.le.s32.totalorder 1, %s16
      %p168 = scmp.lt.s32.totalorder %s16, 3
      %p169 = pnand %p167, %p168
      %p170 = pneg %p169
      // Predicated region
      $region29: #{tpu_custom_call.1} parent=5 // pred_check
        _
      $region30: #{tpu_custom_call.1} parent=5 // pred_check_branch
        %172 = sbr.rel (%p169) target = $region32
      $region31: #{tpu_custom_call.1} parent=5 // pred_region
        %s173 = ssub.s32 %s16, 1
        %s174 = sand.u32 %s29, 1
        %s175 = scalar_lea.sflag [#allocation3], %s174
        %s176 = sand.u32 %s29, 1
        %s177 = smul.addr %s176, 224
        %s178 = scalar_lea.vmem [#allocation2], %s177
        // Predicated region
        $region33: #{tpu_custom_call.1} parent=31 // pred_check
          %p179 = pneg %p42
        $region34: #{tpu_custom_call.1} parent=31 // pred_check_branch
          %181 = sbr.rel (%p179) target = $region36
        $region35: #{tpu_custom_call.1} parent=31 // pred_region
          %182 = dma.done %s175, 3584
        $region36: #{tpu_custom_call.1} parent=31 // pred_fallthru
          _
        // Predicated region
        $region37: #{tpu_custom_call.1} parent=31 // pred_check
          %p183 = pneg %p63
        $region38: #{tpu_custom_call.1} parent=31 // pred_check_branch
          %185 = sbr.rel (%p183) target = $region40
        $region39: #{tpu_custom_call.1} parent=31 // pred_region
          %186 = dma.done [#allocation6], 12544
        $region40: #{tpu_custom_call.1} parent=31 // pred_fallthru
          _
        %s187 = sand.u32 %s29, 1
        %s188 = scalar_lea.sflag [#allocation3], %s187
        %s189 = sand.u32 %s29, 1
        %s190 = smul.addr %s189, 224
        %s191 = scalar_lea.vmem [#allocation2], %s190
        %p192 = pneg %p42
        %p193 = pneg %p39
        %p194 = pneg %p63
        %p195 = pneg %p60
        %p196 = pneg %p84
        %p197 = pneg %p81
        %p198 = pneg %p110
        %p199 = pneg %p107
        %s200 = sand.u32 %s97, 1
        %s201 = scalar_lea.sflag [#allocation4], %s200
        %s202 = sand.u32 %s97, 1
        %s203 = smul.addr %s202, 32
        %s204 = scalar_lea.vmem [#allocation7], %s203
        %s205 = smul.u32 4, %s21
        %s206 = smul.u32 4, %s21
        %v207 = vld [vmem:[%s178] sm:$0xff]
        %v208 = vld [vmem:[%s178 + $0x8] sm:$0xff]
        %v209 = vld [vmem:[%s178 + $0x10] sm:$0xff]
        %v210 = vld [vmem:[%s178 + $0x18] sm:$0xff]
        %v211 = vld [vmem:[%s178 + $0x20] sm:$0xff]
        %v212 = vld [vmem:[%s178 + $0x28] sm:$0xff]
        %v213 = vld [vmem:[%s178 + $0x30] sm:$0xff]
        %v214 = vld [vmem:[%s178 + $0x38] sm:$0xff]
        %v215 = vld [vmem:[%s178 + $0x40] sm:$0xff]
        %v216 = vld [vmem:[%s178 + $0x48] sm:$0xff]
        %v217 = vld [vmem:[%s178 + $0x50] sm:$0xff]
        %v218 = vld [vmem:[%s178 + $0x58] sm:$0xff]
        %v219 = vld [vmem:[%s178 + $0x60] sm:$0xff]
        %v220 = vld [vmem:[%s178 + $0x68] sm:$0xff]
        %v221 = vld [vmem:[%s178 + $0x70] sm:$0xff]
        %v222 = vld [vmem:[%s178 + $0x78] sm:$0xff]
        %v223 = vld [vmem:[%s178 + $0x80] sm:$0xff]
        %v224 = vld [vmem:[%s178 + $0x88] sm:$0xff]
        %v225 = vld [vmem:[%s178 + $0x90] sm:$0xff]
        %v226 = vld [vmem:[%s178 + $0x98] sm:$0xff]
        %v227 = vld [vmem:[%s178 + $0xa0] sm:$0xff]
        %v228 = vld [vmem:[%s178 + $0xa8] sm:$0xff]
        %v229 = vld [vmem:[%s178 + $0xb0] sm:$0xff]
        %v230 = vld [vmem:[%s178 + $0xb8] sm:$0xff]
        %v231 = vld [vmem:[%s178 + $0xc0] sm:$0xff]
        %v232 = vld [vmem:[%s178 + $0xc8] sm:$0xff]
        %v233 = vld [vmem:[%s178 + $0xd0] sm:$0xff]
        %v234 = vld [vmem:[%s178 + $0xd8] sm:$0xff]
        %v235 = vld [vmem:[#allocation5] sm:$0xff]
        %v236 = vld [vmem:[#allocation5 + $0x8] sm:$0xff]
        %v237 = vld [vmem:[#allocation5 + $0x10] sm:$0xff]
        %v238 = vld [vmem:[#allocation5 + $0x18] sm:$0xff]
        %v239 = vld [vmem:[#allocation5 + $0x20] sm:$0xff]
        %v240 = vld [vmem:[#allocation5 + $0x28] sm:$0xff]
        %v241 = vld [vmem:[#allocation5 + $0x30] sm:$0xff]
        %v242 = vld [vmem:[#allocation5 + $0x38] sm:$0xff]
        %v243 = vld [vmem:[#allocation5 + $0x40] sm:$0xff]
        %v244 = vld [vmem:[#allocation5 + $0x48] sm:$0xff]
        %v245 = vld [vmem:[#allocation5 + $0x50] sm:$0xff]
        %v246 = vld [vmem:[#allocation5 + $0x58] sm:$0xff]
        %v247 = vld [vmem:[#allocation5 + $0x60] sm:$0xff]
        %v248 = vld [vmem:[#allocation5 + $0x68] sm:$0xff]
        %v249 = vld [vmem:[#allocation5 + $0x70] sm:$0xff]
        %v250 = vld [vmem:[#allocation5 + $0x78] sm:$0xff]
        %v251 = vld [vmem:[#allocation5 + $0x80] sm:$0xff]
        %v252 = vld [vmem:[#allocation5 + $0x88] sm:$0xff]
        %v253 = vld [vmem:[#allocation5 + $0x90] sm:$0xff]
        %v254 = vld [vmem:[#allocation5 + $0x98] sm:$0xff]
        %v255 = vld [vmem:[#allocation5 + $0xa0] sm:$0xff]
        %v256 = vld [vmem:[#allocation5 + $0xa8] sm:$0xff]
        %v257 = vld [vmem:[#allocation5 + $0xb0] sm:$0xff]
        %v258 = vld [vmem:[#allocation5 + $0xb8] sm:$0xff]
        %v259 = vld [vmem:[#allocation5 + $0xc0] sm:$0xff]
        %v260 = vld [vmem:[#allocation5 + $0xc8] sm:$0xff]
        %v261 = vld [vmem:[#allocation5 + $0xd0] sm:$0xff]
        %v262 = vld [vmem:[#allocation5 + $0xd8] sm:$0xff]
        %v263 = vld [vmem:[#allocation5 + $0xe0] sm:$0xff]
        %v264 = vld [vmem:[#allocation5 + $0xe8] sm:$0xff]
        %v265 = vld [vmem:[#allocation5 + $0xf0] sm:$0xff]
        %v266 = vld [vmem:[#allocation5 + $0xf8] sm:$0xff]
        %v267 = vld [vmem:[#allocation5 + $0x100] sm:$0xff]
        %v268 = vld [vmem:[#allocation5 + $0x108] sm:$0xff]
        %v269 = vld [vmem:[#allocation5 + $0x110] sm:$0xff]
        %v270 = vld [vmem:[#allocation5 + $0x118] sm:$0xff]
        %v271 = vld [vmem:[#allocation5 + $0x120] sm:$0xff]
        %v272 = vld [vmem:[#allocation5 + $0x128] sm:$0xff]
        %v273 = vld [vmem:[#allocation5 + $0x130] sm:$0xff]
        %v274 = vld [vmem:[#allocation5 + $0x138] sm:$0xff]
        %v275 = vld [vmem:[#allocation5 + $0x140] sm:$0xff]
        %v276 = vld [vmem:[#allocation5 + $0x148] sm:$0xff]
        %v277 = vld [vmem:[#allocation5 + $0x150] sm:$0xff]
        %v278 = vld [vmem:[#allocation5 + $0x158] sm:$0xff]
        %v279 = vld [vmem:[#allocation5 + $0x160] sm:$0xff]
        %v280 = vld [vmem:[#allocation5 + $0x168] sm:$0xff]
        %v281 = vld [vmem:[#allocation5 + $0x170] sm:$0xff]
        %v282 = vld [vmem:[#allocation5 + $0x178] sm:$0xff]
        %v283 = vld [vmem:[#allocation5 + $0x180] sm:$0xff]
        %v284 = vld [vmem:[#allocation5 + $0x188] sm:$0xff]
        %v285 = vld [vmem:[#allocation5 + $0x190] sm:$0xff]
        %v286 = vld [vmem:[#allocation5 + $0x198] sm:$0xff]
        %v287 = vld [vmem:[#allocation5 + $0x1a0] sm:$0xff]
        %v288 = vld [vmem:[#allocation5 + $0x1a8] sm:$0xff]
        %v289 = vld [vmem:[#allocation5 + $0x1b0] sm:$0xff]
        %v290 = vld [vmem:[#allocation5 + $0x1b8] sm:$0xff]
        %v291 = vld [vmem:[#allocation5 + $0x1c0] sm:$0xff]
        %v292 = vld [vmem:[#allocation5 + $0x1c8] sm:$0xff]
        %v293 = vld [vmem:[#allocation5 + $0x1d0] sm:$0xff]
        %v294 = vld [vmem:[#allocation5 + $0x1d8] sm:$0xff]
        %v295 = vld [vmem:[#allocation5 + $0x1e0] sm:$0xff]
        %v296 = vld [vmem:[#allocation5 + $0x1e8] sm:$0xff]
        %v297 = vld [vmem:[#allocation5 + $0x1f0] sm:$0xff]
        %v298 = vld [vmem:[#allocation5 + $0x1f8] sm:$0xff]
        %v299 = vld [vmem:[#allocation5 + $0x200] sm:$0xff]
        %v300 = vld [vmem:[#allocation5 + $0x208] sm:$0xff]
        %v301 = vld [vmem:[#allocation5 + $0x210] sm:$0xff]
        %v302 = vld [vmem:[#allocation5 + $0x218] sm:$0xff]
        %v303 = vld [vmem:[#allocation5 + $0x220] sm:$0xff]
        %v304 = vld [vmem:[#allocation5 + $0x228] sm:$0xff]
        %v305 = vld [vmem:[#allocation5 + $0x230] sm:$0xff]
        %v306 = vld [vmem:[#allocation5 + $0x238] sm:$0xff]
        %v307 = vld [vmem:[#allocation5 + $0x240] sm:$0xff]
        %v308 = vld [vmem:[#allocation5 + $0x248] sm:$0xff]
        %v309 = vld [vmem:[#allocation5 + $0x250] sm:$0xff]
        %v310 = vld [vmem:[#allocation5 + $0x258] sm:$0xff]
        %v311 = vld [vmem:[#allocation5 + $0x260] sm:$0xff]
        %v312 = vld [vmem:[#allocation5 + $0x268] sm:$0xff]
        %v313 = vld [vmem:[#allocation5 + $0x270] sm:$0xff]
        %v314 = vld [vmem:[#allocation5 + $0x278] sm:$0xff]
        %v315 = vld [vmem:[#allocation5 + $0x280] sm:$0xff]
        %v316 = vld [vmem:[#allocation5 + $0x288] sm:$0xff]
        %v317 = vld [vmem:[#allocation5 + $0x290] sm:$0xff]
        %v318 = vld [vmem:[#allocation5 + $0x298] sm:$0xff]
        %v319 = vld [vmem:[#allocation5 + $0x2a0] sm:$0xff]
        %v320 = vld [vmem:[#allocation5 + $0x2a8] sm:$0xff]
        %v321 = vld [vmem:[#allocation5 + $0x2b0] sm:$0xff]
        %v322 = vld [vmem:[#allocation5 + $0x2b8] sm:$0xff]
        %v323 = vld [vmem:[#allocation5 + $0x2c0] sm:$0xff]
        %v324 = vld [vmem:[#allocation5 + $0x2c8] sm:$0xff]
        %v325 = vld [vmem:[#allocation5 + $0x2d0] sm:$0xff]
        %v326 = vld [vmem:[#allocation5 + $0x2d8] sm:$0xff]
        %v327 = vld [vmem:[#allocation5 + $0x2e0] sm:$0xff]
        %v328 = vld [vmem:[#allocation5 + $0x2e8] sm:$0xff]
        %v329 = vld [vmem:[#allocation5 + $0x2f0] sm:$0xff]
        %v330 = vld [vmem:[#allocation5 + $0x2f8] sm:$0xff]
        %v331 = vld [vmem:[#allocation5 + $0x300] sm:$0xff]
        %v332 = vld [vmem:[#allocation5 + $0x308] sm:$0xff]
        %v333 = vld [vmem:[%s2] sm:$0x1]
        %v335 = vlaneseq
        %v336 = vshrl.u32 %v335, 7
        %v337 = vsub.s32 0, %v336
        %v338 = vrot.slane %v333, %v337
        %vm340 = vcmask 130048
        %v342 = vsel %vm340, %v213, 0
        %v345 = vsel %vm340, %v220, 0
        %v348 = vsel %vm340, %v227, 0
        %v351 = vsel %vm340, %v234, 0
        %353 = vmatprep.subr.mxu0 0.0
        %354 = vmatpush1.msra.mxu0 %v250
        %355 = vmatprep.subr.mxu0 0.0
        %356 = vmatpush1.msra.mxu0 %v249
        %357 = vmatprep.subr.mxu0 0.0
        %358 = vmatpush1.msra.mxu0 %v248
        %359 = vmatprep.subr.mxu0 0.0
        %360 = vmatpush1.msra.mxu0 %v247
        %361 = vmatprep.subr.mxu0 0.0
        %362 = vmatpush1.msra.mxu0 %v246
        %363 = vmatprep.subr.mxu0 0.0
        %364 = vmatpush1.msra.mxu0 %v245
        %365 = vmatprep.subr.mxu0 0.0
        %366 = vmatpush1.msra.mxu0 %v244
        %367 = vmatprep.subr.mxu0 0.0
        %368 = vmatpush1.msra.mxu0 %v243
        %369 = vmatprep.subr.mxu0 0.0
        %370 = vmatpush1.msra.mxu0 %v242
        %371 = vmatprep.subr.mxu0 0.0
        %372 = vmatpush1.msra.mxu0 %v241
        %373 = vmatprep.subr.mxu0 0.0
        %374 = vmatpush1.msra.mxu0 %v240
        %375 = vmatprep.subr.mxu0 0.0
        %376 = vmatpush1.msra.mxu0 %v239
        %377 = vmatprep.subr.mxu0 0.0
        %378 = vmatpush1.msra.mxu0 %v238
        %379 = vmatprep.subr.mxu0 0.0
        %380 = vmatpush1.msra.mxu0 %v237
        %381 = vmatprep.subr.mxu0 0.0
        %382 = vmatpush1.msra.mxu0 %v236
        %383 = vmatprep.subr.mxu0 0.0
        %384 = vmatpush1.msra.mxu0 %v235
        %385 = vmatprep.subr.mxu0 0.0
        %386 = vmatpush2.msra.mxu0 %v266
        %387 = vmatprep.subr.mxu0 0.0
        %388 = vmatpush2.msra.mxu0 %v265
        %389 = vmatprep.subr.mxu0 0.0
        %390 = vmatpush2.msra.mxu0 %v264
        %391 = vmatprep.subr.mxu0 0.0
        %392 = vmatpush2.msra.mxu0 %v263
        %393 = vmatprep.subr.mxu0 0.0
        %394 = vmatpush2.msra.mxu0 %v262
        %395 = vmatprep.subr.mxu0 0.0
        %396 = vmatpush2.msra.mxu0 %v261
        %397 = vmatprep.subr.mxu0 0.0
        %398 = vmatpush2.msra.mxu0 %v260
        %399 = vmatprep.subr.mxu0 0.0
        %400 = vmatpush2.msra.mxu0 %v259
        %401 = vmatprep.subr.mxu0 0.0
        %402 = vmatpush2.msra.mxu0 %v258
        %403 = vmatprep.subr.mxu0 0.0
        %404 = vmatpush2.msra.mxu0 %v257
        %405 = vmatprep.subr.mxu0 0.0
        %406 = vmatpush2.msra.mxu0 %v256
        %407 = vmatprep.subr.mxu0 0.0
        %408 = vmatpush2.msra.mxu0 %v255
        %409 = vmatprep.subr.mxu0 0.0
        %410 = vmatpush2.msra.mxu0 %v254
        %411 = vmatprep.subr.mxu0 0.0
        %412 = vmatpush2.msra.mxu0 %v253
        %413 = vmatprep.subr.mxu0 0.0
        %414 = vmatpush2.msra.mxu0 %v252
        %415 = vmatprep.subr.mxu0 0.0
        %416 = vmatpush2.msra.mxu0 %v251
        %417 = vmatprep.mubr.f32.mxu0 %v208
        %418 = vmatmul.mubr.f32.gmra.mxu0 %v207
        %v419 = vpop.f32.mrf.mxu0
        %v420 = vadd.f32 %v338, %v419
        %v421 = vpop.f32.mrf.mxu0
        %422 = vmatprep.mubr.f32.mxu0 %v215
        %423 = vmatmul.mubr.f32.gmra.mxu0 %v214
        %v424 = vpop.f32.mrf.mxu0
        %v425 = vadd.f32 %v338, %v424
        %v426 = vpop.f32.mrf.mxu0
        %427 = vmatprep.mubr.f32.mxu0 %v222
        %428 = vmatmul.mubr.f32.gmra.mxu0 %v221
        %v429 = vpop.f32.mrf.mxu0
        %v430 = vadd.f32 %v338, %v429
        %v431 = vpop.f32.mrf.mxu0
        %432 = vmatprep.mubr.f32.mxu0 %v229
        %433 = vmatmul.mubr.f32.gmra.mxu0 %v228
        %v434 = vpop.f32.mrf.mxu0
        %v435 = vadd.f32 %v338, %v434
        %v436 = vpop.f32.mrf.mxu0
        %437 = vdwg.mxu0
        %438 = vmatprep.subr.mxu0 0.0
        %439 = vmatpush1.msra.mxu0 %v282
        %440 = vmatprep.subr.mxu0 0.0
        %441 = vmatpush1.msra.mxu0 %v281
        %442 = vmatprep.subr.mxu0 0.0
        %443 = vmatpush1.msra.mxu0 %v280
        %444 = vmatprep.subr.mxu0 0.0
        %445 = vmatpush1.msra.mxu0 %v279
        %446 = vmatprep.subr.mxu0 0.0
        %447 = vmatpush1.msra.mxu0 %v278
        %448 = vmatprep.subr.mxu0 0.0
        %449 = vmatpush1.msra.mxu0 %v277
        %450 = vmatprep.subr.mxu0 0.0
        %451 = vmatpush1.msra.mxu0 %v276
        %452 = vmatprep.subr.mxu0 0.0
        %453 = vmatpush1.msra.mxu0 %v275
        %454 = vmatprep.subr.mxu0 0.0
        %455 = vmatpush1.msra.mxu0 %v274
        %456 = vmatprep.subr.mxu0 0.0
        %457 = vmatpush1.msra.mxu0 %v273
        %458 = vmatprep.subr.mxu0 0.0
        %459 = vmatpush1.msra.mxu0 %v272
        %460 = vmatprep.subr.mxu0 0.0
        %461 = vmatpush1.msra.mxu0 %v271
        %462 = vmatprep.subr.mxu0 0.0
        %463 = vmatpush1.msra.mxu0 %v270
        %464 = vmatprep.subr.mxu0 0.0
        %465 = vmatpush1.msra.mxu0 %v269
        %466 = vmatprep.subr.mxu0 0.0
        %467 = vmatpush1.msra.mxu0 %v268
        %468 = vmatprep.subr.mxu0 0.0
        %469 = vmatpush1.msra.mxu0 %v267
        %470 = vmatprep.subr.mxu0 0.0
        %471 = vmatpush2.msra.mxu0 %v298
        %472 = vmatprep.subr.mxu0 0.0
        %473 = vmatpush2.msra.mxu0 %v297
        %474 = vmatprep.subr.mxu0 0.0
        %475 = vmatpush2.msra.mxu0 %v296
        %476 = vmatprep.subr.mxu0 0.0
        %477 = vmatpush2.msra.mxu0 %v295
        %478 = vmatprep.subr.mxu0 0.0
        %479 = vmatpush2.msra.mxu0 %v294
        %480 = vmatprep.subr.mxu0 0.0
        %481 = vmatpush2.msra.mxu0 %v293
        %482 = vmatprep.subr.mxu0 0.0
        %483 = vmatpush2.msra.mxu0 %v292
        %484 = vmatprep.subr.mxu0 0.0
        %485 = vmatpush2.msra.mxu0 %v291
        %486 = vmatprep.subr.mxu0 0.0
        %487 = vmatpush2.msra.mxu0 %v290
        %488 = vmatprep.subr.mxu0 0.0
        %489 = vmatpush2.msra.mxu0 %v289
        %490 = vmatprep.subr.mxu0 0.0
        %491 = vmatpush2.msra.mxu0 %v288
        %492 = vmatprep.subr.mxu0 0.0
        %493 = vmatpush2.msra.mxu0 %v287
        %494 = vmatprep.subr.mxu0 0.0
        %495 = vmatpush2.msra.mxu0 %v286
        %496 = vmatprep.subr.mxu0 0.0
        %497 = vmatpush2.msra.mxu0 %v285
        %498 = vmatprep.subr.mxu0 0.0
        %499 = vmatpush2.msra.mxu0 %v284
        %500 = vmatprep.subr.mxu0 0.0
        %501 = vmatpush2.msra.mxu0 %v283
        %502 = vmatprep.mubr.f32.mxu0 %v210
        %503 = vmatmul.mubr.f32.gmra.mxu0 %v209
        %v504 = vpop.f32.mrf.mxu0
        %v505 = vadd.f32 %v420, %v504
        %v506 = vpop.f32.mrf.mxu0
        %507 = vmatprep.mubr.f32.mxu0 %v217
        %508 = vmatmul.mubr.f32.gmra.mxu0 %v216
        %v509 = vpop.f32.mrf.mxu0
        %v510 = vadd.f32 %v425, %v509
        %v511 = vpop.f32.mrf.mxu0
        %512 = vmatprep.mubr.f32.mxu0 %v224
        %513 = vmatmul.mubr.f32.gmra.mxu0 %v223
        %v514 = vpop.f32.mrf.mxu0
        %v515 = vadd.f32 %v430, %v514
        %v516 = vpop.f32.mrf.mxu0
        %517 = vmatprep.mubr.f32.mxu0 %v231
        %518 = vmatmul.mubr.f32.gmra.mxu0 %v230
        %v519 = vpop.f32.mrf.mxu0
        %v520 = vadd.f32 %v435, %v519
        %v521 = vpop.f32.mrf.mxu0
        %522 = vdwg.mxu0
        %523 = vmatprep.subr.mxu0 0.0
        %524 = vmatpush1.msra.mxu0 %v314
        %525 = vmatprep.subr.mxu0 0.0
        %526 = vmatpush1.msra.mxu0 %v313
        %527 = vmatprep.subr.mxu0 0.0
        %528 = vmatpush1.msra.mxu0 %v312
        %529 = vmatprep.subr.mxu0 0.0
        %530 = vmatpush1.msra.mxu0 %v311
        %531 = vmatprep.subr.mxu0 0.0
        %532 = vmatpush1.msra.mxu0 %v310
        %533 = vmatprep.subr.mxu0 0.0
        %534 = vmatpush1.msra.mxu0 %v309
        %535 = vmatprep.subr.mxu0 0.0
        %536 = vmatpush1.msra.mxu0 %v308
        %537 = vmatprep.subr.mxu0 0.0
        %538 = vmatpush1.msra.mxu0 %v307
        %539 = vmatprep.subr.mxu0 0.0
        %540 = vmatpush1.msra.mxu0 %v306
        %541 = vmatprep.subr.mxu0 0.0
        %542 = vmatpush1.msra.mxu0 %v305
        %543 = vmatprep.subr.mxu0 0.0
        %544 = vmatpush1.msra.mxu0 %v304
        %545 = vmatprep.subr.mxu0 0.0
        %546 = vmatpush1.msra.mxu0 %v303
        %547 = vmatprep.subr.mxu0 0.0
        %548 = vmatpush1.msra.mxu0 %v302
        %549 = vmatprep.subr.mxu0 0.0
        %550 = vmatpush1.msra.mxu0 %v301
        %551 = vmatprep.subr.mxu0 0.0
        %552 = vmatpush1.msra.mxu0 %v300
        %553 = vmatprep.subr.mxu0 0.0
        %554 = vmatpush1.msra.mxu0 %v299
        %555 = vmatprep.subr.mxu0 0.0
        %556 = vmatpush2.msra.mxu0 %v330
        %557 = vmatprep.subr.mxu0 0.0
        %558 = vmatpush2.msra.mxu0 %v329
        %559 = vmatprep.subr.mxu0 0.0
        %560 = vmatpush2.msra.mxu0 %v328
        %561 = vmatprep.subr.mxu0 0.0
        %562 = vmatpush2.msra.mxu0 %v327
        %563 = vmatprep.subr.mxu0 0.0
        %564 = vmatpush2.msra.mxu0 %v326
        %565 = vmatprep.subr.mxu0 0.0
        %566 = vmatpush2.msra.mxu0 %v325
        %567 = vmatprep.subr.mxu0 0.0
        %568 = vmatpush2.msra.mxu0 %v324
        %569 = vmatprep.subr.mxu0 0.0
        %570 = vmatpush2.msra.mxu0 %v323
        %571 = vmatprep.subr.mxu0 0.0
        %572 = vmatpush2.msra.mxu0 %v322
        %573 = vmatprep.subr.mxu0 0.0
        %574 = vmatpush2.msra.mxu0 %v321
        %575 = vmatprep.subr.mxu0 0.0
        %576 = vmatpush2.msra.mxu0 %v320
        %577 = vmatprep.subr.mxu0 0.0
        %578 = vmatpush2.msra.mxu0 %v319
        %579 = vmatprep.subr.mxu0 0.0
        %580 = vmatpush2.msra.mxu0 %v318
        %581 = vmatprep.subr.mxu0 0.0
        %582 = vmatpush2.msra.mxu0 %v317
        %583 = vmatprep.subr.mxu0 0.0
        %584 = vmatpush2.msra.mxu0 %v316
        %585 = vmatprep.subr.mxu0 0.0
        %586 = vmatpush2.msra.mxu0 %v315
        %587 = vmatprep.mubr.f32.mxu0 %v212
        %588 = vmatmul.mubr.f32.gmra.mxu0 %v211
        %v589 = vpop.f32.mrf.mxu0
        %v590 = vadd.f32 %v505, %v589
        %v591 = vpop.f32.mrf.mxu0
        %592 = vmatprep.mubr.f32.mxu0 %v219
        %593 = vmatmul.mubr.f32.gmra.mxu0 %v218
        %v594 = vpop.f32.mrf.mxu0
        %v595 = vadd.f32 %v510, %v594
        %v596 = vpop.f32.mrf.mxu0
        %597 = vmatprep.mubr.f32.mxu0 %v226
        %598 = vmatmul.mubr.f32.gmra.mxu0 %v225
        %v599 = vpop.f32.mrf.mxu0
        %v600 = vadd.f32 %v515, %v599
        %v601 = vpop.f32.mrf.mxu0
        %602 = vmatprep.mubr.f32.mxu0 %v233
        %603 = vmatmul.mubr.f32.gmra.mxu0 %v232
        %v604 = vpop.f32.mrf.mxu0
        %v605 = vadd.f32 %v520, %v604
        %v606 = vpop.f32.mrf.mxu0
        %607 = vdwg.mxu0
        %608 = vmatprep.subr.mxu0 0.0
        %609 = vmatpush1.msra.mxu0 0.0
        %610 = vmatprep.subr.mxu0 0.0
        %611 = vmatpush1.msra.mxu0 0.0
        %612 = vmatprep.subr.mxu0 0.0
        %613 = vmatpush1.msra.mxu0 0.0
        %614 = vmatprep.subr.mxu0 0.0
        %615 = vmatpush1.msra.mxu0 0.0
        %616 = vmatprep.subr.mxu0 0.0
        %617 = vmatpush1.msra.mxu0 0.0
        %618 = vmatprep.subr.mxu0 0.0
        %619 = vmatpush1.msra.mxu0 0.0
        %620 = vmatprep.subr.mxu0 0.0
        %621 = vmatpush1.msra.mxu0 0.0
        %622 = vmatprep.subr.mxu0 0.0
        %623 = vmatpush1.msra.mxu0 0.0
        %624 = vmatprep.subr.mxu0 0.0
        %625 = vmatpush1.msra.mxu0 0.0
        %626 = vmatprep.subr.mxu0 0.0
        %627 = vmatpush1.msra.mxu0 0.0
        %628 = vmatprep.subr.mxu0 0.0
        %629 = vmatpush1.msra.mxu0 0.0
        %630 = vmatprep.subr.mxu0 0.0
        %631 = vmatpush1.msra.mxu0 0.0
        %632 = vmatprep.subr.mxu0 0.0
        %633 = vmatpush1.msra.mxu0 0.0
        %634 = vmatprep.subr.mxu0 0.0
        %635 = vmatpush1.msra.mxu0 0.0
        %636 = vmatprep.subr.mxu0 0.0
        %637 = vmatpush1.msra.mxu0 %v332
        %638 = vmatprep.subr.mxu0 0.0
        %639 = vmatpush1.msra.mxu0 %v331
        %640 = vmatprep.subr.mxu0 0.0
        %641 = vmatpush2.msra.mxu0 0.0
        %642 = vmatprep.subr.mxu0 0.0
        %643 = vmatpush2.msra.mxu0 0.0
        %644 = vmatprep.subr.mxu0 0.0
        %645 = vmatpush2.msra.mxu0 0.0
        %646 = vmatprep.subr.mxu0 0.0
        %647 = vmatpush2.msra.mxu0 0.0
        %648 = vmatprep.subr.mxu0 0.0
        %649 = vmatpush2.msra.mxu0 0.0
        %650 = vmatprep.subr.mxu0 0.0
        %651 = vmatpush2.msra.mxu0 0.0
        %652 = vmatprep.subr.mxu0 0.0
        %653 = vmatpush2.msra.mxu0 0.0
        %654 = vmatprep.subr.mxu0 0.0
        %655 = vmatpush2.msra.mxu0 0.0
        %656 = vmatprep.subr.mxu0 0.0
        %657 = vmatpush2.msra.mxu0 0.0
        %658 = vmatprep.subr.mxu0 0.0
        %659 = vmatpush2.msra.mxu0 0.0
        %660 = vmatprep.subr.mxu0 0.0
        %661 = vmatpush2.msra.mxu0 0.0
        %662 = vmatprep.subr.mxu0 0.0
        %663 = vmatpush2.msra.mxu0 0.0
        %664 = vmatprep.subr.mxu0 0.0
        %665 = vmatpush2.msra.mxu0 0.0
        %666 = vmatprep.subr.mxu0 0.0
        %667 = vmatpush2.msra.mxu0 0.0
        %668 = vmatprep.subr.mxu0 0.0
        %669 = vmatpush2.msra.mxu0 0.0
        %670 = vmatprep.subr.mxu0 0.0
        %671 = vmatpush2.msra.mxu0 0.0
        %672 = vmatprep.mubr.f32.mxu0 0.0
        %673 = vmatmul.mubr.f32.gmra.mxu0 %v342
        %v674 = vpop.f32.mrf.mxu0
        %v675 = vadd.f32 %v590, %v674
        %v676 = vpop.f32.mrf.mxu0
        %677 = vmatprep.mubr.f32.mxu0 0.0
        %678 = vmatmul.mubr.f32.gmra.mxu0 %v345
        %v679 = vpop.f32.mrf.mxu0
        %v680 = vadd.f32 %v595, %v679
        %v681 = vpop.f32.mrf.mxu0
        %682 = vmatprep.mubr.f32.mxu0 0.0
        %683 = vmatmul.mubr.f32.gmra.mxu0 %v348
        %v684 = vpop.f32.mrf.mxu0
        %v685 = vadd.f32 %v600, %v684
        %v686 = vpop.f32.mrf.mxu0
        %687 = vmatprep.mubr.f32.mxu0 0.0
        %688 = vmatmul.mubr.f32.gmra.mxu0 %v351
        %v689 = vpop.f32.mrf.mxu0
        %v690 = vadd.f32 %v605, %v689
        %v691 = vpop.f32.mrf.mxu0
        %692 = vdwg.mxu0
        %693 = vst [vmem:[%s204] sm:$0xff] %v675
        %694 = vst [vmem:[%s204 + $0x8] sm:$0xff] %v680
        %695 = vst [vmem:[%s204 + $0x10] sm:$0xff] %v685
        %696 = vst [vmem:[%s204 + $0x18] sm:$0xff] %v690
        %s697 = sand.u32 %s97, 1
        %s698 = scalar_lea.sflag [#allocation4], %s697
        %s699 = sand.u32 %s97, 1
        %s700 = smul.addr %s699, 32
        %s701 = scalar_lea.vmem [#allocation7], %s700
        // Predicated region
        $region41: #{tpu_custom_call.1} parent=31 // pred_check
          %p702 = pneg %p107
        $region42: #{tpu_custom_call.1} parent=31 // pred_check_branch
          %704 = sbr.rel (%p702) target = $region44
        $region43: #{tpu_custom_call.1} parent=31 // pred_region
          %s705 = smul.u32 4, %s21
          %s707 = ssub.s32 512, 512
          %708 = vsyncadd %s698, %s707
          %s709 = smul.addr %s705, 128
          %s710 = scalar_lea.hbm %s3, %s709
          %s711 = sshll.u32 %s701, 4
          %s712 = int_to_ptr.vmem [resolvable:$true] %s711
          %717 = dma.vmem_to_hbm [thread:$0]  %s712, 512, %s710, %s698, 128, 128, 8
        $region44: #{tpu_custom_call.1} parent=31 // pred_fallthru
          _
      $region32: #{tpu_custom_call.1} parent=5 // pred_fallthru
        _
      %p718 = scmp.le.s32.totalorder 2, %s16
      // Predicated region
      $region45: #{tpu_custom_call.1} parent=5 // pred_check
        %p719 = pneg %p718
      $region46: #{tpu_custom_call.1} parent=5 // pred_check_branch
        %721 = sbr.rel (%p719) target = $region48
      $region47: #{tpu_custom_call.1} parent=5 // pred_region
        %s722 = ssub.s32 %s16, 2
        // Predicated region
        $region49: #{tpu_custom_call.1} parent=47 // pred_check
          %p723 = pneg %p113
        $region50: #{tpu_custom_call.1} parent=47 // pred_check_branch
          %725 = sbr.rel (%p723) target = $region52
        $region51: #{tpu_custom_call.1} parent=47 // pred_region
          %s726 = sand.u32 %s98, 1
          %s727 = scalar_lea.sflag [#allocation4], %s726
          %s728 = sand.u32 %s98, 1
          %s729 = smul.addr %s728, 32
          %s730 = scalar_lea.vmem [#allocation7], %s729
          %731 = dma.done %s727, 512
        $region52: #{tpu_custom_call.1} parent=47 // pred_fallthru
          _
      $region48: #{tpu_custom_call.1} parent=5 // pred_fallthru
        _
    $region6: #{tpu_custom_call.1} parent=1 // loop_footer
      %s20 = sadd.s32 1, %s16
    $region7: #{tpu_custom_call.1} parent=1 // loop_footer_branch
      %15 = sbr.rel target = $region3
    $region8: #{tpu_custom_call.1} parent=1 // loop_exit
      _
    %732 = vsyncpa [#allocation3], 1
    %s733 = scalar_lea.sflag [#allocation3], 1
    %734 = vsyncpa %s733, 1
    %735 = vsyncpa [#allocation6], 1
    %736 = vsyncpa [#allocation4], 1
    %s737 = scalar_lea.sflag [#allocation4], 1
    %738 = vsyncpa %s737, 1

</llo_original>
